<compile_context>
chip_gen: v7x
topology: tpu7x:2x2x1
jax: 0.10.0
libtpu: 0.0.40
codegen_flags: <defaults>
</compile_context>

<pallas_src>
import functools

import jax
import jax.numpy as jnp
from jax.experimental import pallas as pl
from jax.experimental.pallas import tpu as pltpu

POOL = 4                          # HEALPix pooling factor (kernel_size of the MaxPool1d)
BN_EPS = 1e-5
_VMEM_LIMIT = 64 * 1024 * 1024    # v5e/v6e; use ~48 MiB (and nb >= 2) on v7x


def _pool_cheb(x_ref, lap_ref, w_ref, b_ref, *, bt, vp, cin, kdeg):
    """Shared body: HEALPix max-pool + fused Chebyshev conv for one batch block.

    x_ref  : (bt*vp, POOL*cin) f32   rows ordered (b, v); the 4 vertices of a pooling
                                     group are 4 contiguous lane slices of width cin
    lap_ref: (vp, vp)          bf16  dense rescaled graph Laplacian (pre-cast)
    w_ref  : (kdeg*cin, cout)  bf16  Chebyshev weights, rows ordered (k, c) (pre-reshaped)
    b_ref  : (1, cout)         f32   bias

    Returns the f32 pre-BN activations, shape (bt*vp, cout), rows ordered (b, v).
    """
    xb = x_ref[...]                                          # (bt*vp, POOL*cin)

    # 1) HEALPix max pooling (exact, in the input dtype).
    pooled = xb[:, 0:cin]
    for p in range(1, POOL):
        pooled = jnp.maximum(pooled, xb[:, p * cin:(p + 1) * cin])
    pooled = pooled.astype(jnp.bfloat16)                     # bf16 state, cast once

    # 2) Relayout rows (b, v) -> state (vp, bt*cin) with lanes ordered (b, c), so each
    #    Laplacian application is a single (vp,vp)@(vp,bt*cin) MXU matmul with batch in
    #    the lane (N) dimension.  Static slices + concat only (bt, kdeg are Python ints).
    if bt == 1:
        t0 = pooled
    else:
        t0 = jnp.concatenate([pooled[b * vp:(b + 1) * vp, :] for b in range(bt)], axis=1)

    lap = lap_ref[...]                                       # (vp, vp) bf16

    ts = [t0]                                                # T_0(L) x = x
    if kdeg > 1:
        ts.append(jnp.dot(lap, t0, preferred_element_type=jnp.float32)
                  .astype(jnp.bfloat16))                     # T_1(L) x = L x
        for _ in range(2, kdeg):                             # static unroll, K is small
            t_next = (2.0 * jnp.dot(lap, ts[-1], preferred_element_type=jnp.float32)
                      - ts[-2].astype(jnp.float32))
            ts.append(t_next.astype(jnp.bfloat16))

    # 3) Fused weight matmul: relayout each T_k back to rows (b, v) and lay them side
    #    by side along lanes -> one (bt*vp, kdeg*cin) @ (kdeg*cin, cout) MXU call.
    def to_rows(t):                                          # (vp, bt*cin) -> (bt*vp, cin)
        if bt == 1:
            return t
        return jnp.concatenate([t[:, b * cin:(b + 1) * cin] for b in range(bt)], axis=0)

    if kdeg == 1:
        t_all = to_rows(ts[0])
    else:
        t_all = jnp.concatenate([to_rows(t) for t in ts], axis=1)   # (bt*vp, kdeg*cin)

    acc = jnp.dot(t_all, w_ref[...], preferred_element_type=jnp.float32)  # (bt*vp, cout)
    return acc + b_ref[...]                                  # bias broadcast (1, cout)


def _pool_cheb_bn_elu_kernel(x_ref, lap_ref, w_ref, b_ref, g_ref, beta_ref, o_ref,
                             *, bt, vp, cin, kdeg):
    """Single-pass path (nb == 1): pool + Chebyshev conv + BatchNorm(train) + ELU."""
    acc = _pool_cheb(x_ref, lap_ref, w_ref, b_ref, bt=bt, vp=vp, cin=cin, kdeg=kdeg)
    inv_n = 1.0 / float(bt * vp)                             # bt == B here (nb == 1)
    mean = jnp.sum(acc, axis=0, keepdims=True) * inv_n       # (1, cout)
    d = acc - mean
    var = jnp.sum(d * d, axis=0, keepdims=True) * inv_n      # two-pass biased variance
    scale = g_ref[...] * jax.lax.rsqrt(var + BN_EPS)
    z = d * scale + beta_ref[...]
    # ELU(alpha=1); exp(min(z,0))-1 keeps the untaken branch finite.
    elu = jnp.where(z > 0, z, jnp.exp(jnp.minimum(z, 0.0)) - 1.0)
    # TODO(synk): nn.Dropout(p=0.1) is stochastic in train mode; applied as identity (eval).
    o_ref[...] = elu.astype(o_ref.dtype)


def _pool_cheb_stats_kernel(x_ref, lap_ref, w_ref, b_ref, y_ref, ssum_ref, ssq_ref,
                            *, bt, vp, cin, kdeg):
    """Two-pass path kernel 1 (nb > 1): conv output (bf16) + per-block BN partial sums."""
    acc = _pool_cheb(x_ref, lap_ref, w_ref, b_ref, bt=bt, vp=vp, cin=cin, kdeg=kdeg)
    y_ref[...] = acc.astype(y_ref.dtype)
    ssum_ref[...] = jnp.sum(acc, axis=0, keepdims=True)
    ssq_ref[...] = jnp.sum(acc * acc, axis=0, keepdims=True)


def _bn_elu_kernel(y_ref, scale_ref, shift_ref, o_ref):
    """Two-pass path kernel 2: pure FMA (hoisted BN scale/shift) + ELU."""
    z = y_ref[...].astype(jnp.float32) * scale_ref[...] + shift_ref[...]
    elu = jnp.where(z > 0, z, jnp.exp(jnp.minimum(z, 0.0)) - 1.0)
    # TODO(synk): Dropout(p=0.1) applied as identity (eval semantics).
    o_ref[...] = elu.astype(o_ref.dtype)


def spherical_cheb_pool(x, lap, weight, bias, gamma, beta, *, bt=None,
                        vmem_limit_bytes=_VMEM_LIMIT):
    """Forward pass of SphericalChebPool.  x: (B, V, Cin) -> (B, V//4, Cout)."""
    B, V, Cin = x.shape
    assert V % POOL == 0
    Vp = V // POOL
    K, Cin_w, Cout = weight.shape
    assert Cin_w == Cin

    if bt is None:
        # Small problems: one fat block -> fused single-kernel path.
        # On v7x with large B*Vp prefer bt = B // 2 (nb >= 2) so the "parallel" batch
        # axis shards across both TensorCores (and cap vmem_limit_bytes ~48 MiB).
        bt = B
    assert B % bt == 0, "batch tile must divide the batch size"
    nb = B // bt

    # Wrapper-side layout prep: row-major reshapes are metadata-only; lap/weight are
    # pre-cast to bf16 (they are consumed at bf16 on the MXU anyway).
    x2 = x.reshape(B * Vp, POOL * Cin)
    lap_bf = lap.astype(jnp.bfloat16)
    w2 = weight.reshape(K * Cin, Cout).astype(jnp.bfloat16)   # rows ordered (k, c)
    bias2 = bias.reshape(1, Cout).astype(jnp.float32)
    gamma2 = gamma.reshape(1, Cout).astype(jnp.float32)
    beta2 = beta.reshape(1, Cout).astype(jnp.float32)

    # NOTE: the dense (Vp, Vp) Laplacian resident in VMEM limits scalability for very
    # large HEALPix resolutions; a sparse/blocked Laplacian would need a manual-DMA path.
    common_in_specs = [
        pl.BlockSpec((bt * Vp, POOL * Cin), lambda i: (i, 0)),
        pl.BlockSpec((Vp, Vp), lambda i: (0, 0)),
        pl.BlockSpec((K * Cin, Cout), lambda i: (0, 0)),
        pl.BlockSpec((1, Cout), lambda i: (0, 0)),
    ]
    cparams = pltpu.CompilerParams(
        dimension_semantics=("parallel",),     # batch blocks are independent
        vmem_limit_bytes=vmem_limit_bytes,
    )

    if nb == 1:
        # Fused path: the single block's statistics ARE the global BN statistics, so
        # BN + ELU happen in-kernel and the bf16 y HBM round-trip is skipped entirely.
        kern = functools.partial(_pool_cheb_bn_elu_kernel, bt=bt, vp=Vp, cin=Cin, kdeg=K)
        out2 = pl.pallas_call(
            kern,
            out_shape=jax.ShapeDtypeStruct((B * Vp, Cout), jnp.float32),
            grid=(1,),
            in_specs=common_in_specs + [
                pl.BlockSpec((1, Cout), lambda i: (0, 0)),
                pl.BlockSpec((1, Cout), lambda i: (0, 0)),
            ],
            out_specs=pl.BlockSpec((bt * Vp, Cout), lambda i: (i, 0)),
            compiler_params=cparams,
        )(x2, lap_bf, w2, bias2, gamma2, beta2)
        return out2.reshape(B, Vp, Cout)                     # metadata-only

    # Two-pass path (nb > 1), e.g. to shard the batch axis across v7x's two TensorCores.
    k1 = functools.partial(_pool_cheb_stats_kernel, bt=bt, vp=Vp, cin=Cin, kdeg=K)
    y2, ssum, ssq = pl.pallas_call(
        k1,
        out_shape=(
            jax.ShapeDtypeStruct((B * Vp, Cout), jnp.bfloat16),  # pre-BN activations
            jax.ShapeDtypeStruct((nb, Cout), jnp.float32),       # per-block sum
            jax.ShapeDtypeStruct((nb, Cout), jnp.float32),       # per-block sum of squares
        ),
        grid=(nb,),
        in_specs=common_in_specs,
        out_specs=(
            pl.BlockSpec((bt * Vp, Cout), lambda i: (i, 0)),
            pl.BlockSpec((1, Cout), lambda i: (i, 0)),
            pl.BlockSpec((1, Cout), lambda i: (i, 0)),
        ),
        compiler_params=cparams,
    )(x2, lap_bf, w2, bias2)

    # Hoisted BN scale/shift: tiny XLA ops between the two calls (no per-step redundant
    # reductions / rsqrt inside kernel 2).  Biased (train-mode) variance, clamped at 0.
    inv_count = 1.0 / float(B * Vp)
    mean = jnp.sum(ssum, axis=0, keepdims=True) * inv_count
    var = jnp.maximum(jnp.sum(ssq, axis=0, keepdims=True) * inv_count - mean * mean, 0.0)
    scale = gamma2 * jax.lax.rsqrt(var + BN_EPS)
    shift = beta2 - mean * scale

    out2 = pl.pallas_call(
        _bn_elu_kernel,
        out_shape=jax.ShapeDtypeStruct((B * Vp, Cout), jnp.float32),
        grid=(nb,),
        in_specs=[
            pl.BlockSpec((bt * Vp, Cout), lambda i: (i, 0)),
            pl.BlockSpec((1, Cout), lambda i: (0, 0)),
            pl.BlockSpec((1, Cout), lambda i: (0, 0)),
        ],
        out_specs=pl.BlockSpec((bt * Vp, Cout), lambda i: (i, 0)),
        compiler_params=cparams,
    )(y2, scale, shift)

    return out2.reshape(B, Vp, Cout)                         # metadata-only


def _reference(x, lap, weight, bias, gamma, beta):
    """Pure-JAX reference of the module's forward pass (f32 everywhere)."""
    B, V, Cin = x.shape
    Vp = V // POOL
    K = weight.shape[0]
    pooled = x.reshape(B, Vp, POOL, Cin).max(axis=2)
    ts = [pooled, jnp.einsum("uv,bvc->buc", lap, pooled)]
    for _ in range(2, K):
        ts.append(2.0 * jnp.einsum("uv,bvc->buc", lap, ts[-1]) - ts[-2])
    y = jnp.einsum("kbvc,kco->bvo", jnp.stack(ts[:K]), weight) + bias
    mean = jnp.mean(y, axis=(0, 1), keepdims=True)
    var = jnp.mean((y - mean) ** 2, axis=(0, 1), keepdims=True)
    z = (y - mean) * jax.lax.rsqrt(var + BN_EPS) * gamma + beta
    return jnp.where(z > 0, z, jnp.exp(jnp.minimum(z, 0.0)) - 1.0)


if __name__ == "__main__":
    key = jax.random.PRNGKey(0)
    B, V, Cin, Cout, Kdeg = 2, 64, 4, 8, 3      # input: [batch, vertices, channels]
    Vp = V // POOL                              # Vp is a multiple of 8 (tile-aligned)

    k_x, k_w = jax.random.split(key)
    x = jax.random.normal(k_x, (B, V, Cin), dtype=jnp.float32)

    # Deterministic rescaled Laplacian on a ring graph over the pooled vertices:
    # L_norm = I - D^{-1/2} A D^{-1/2}; rescaled to [-1, 1] => L = L_norm - I = -A/2.
    idx = jnp.arange(Vp)
    adj = (jnp.zeros((Vp, Vp), dtype=jnp.float32)
           .at[idx, (idx + 1) % Vp].set(1.0)
           .at[idx, (idx - 1) % Vp].set(1.0))
    lap = -0.5 * adj

    # Chebyshev weights (K, Cin, Cout): kaiming-style deterministic init.
    std = (2.0 / (Cin * Kdeg)) ** 0.5
    weight = std * jax.random.normal(k_w, (Kdeg, Cin, Cout), dtype=jnp.float32)
    bias = jnp.full((Cout,), 0.01, dtype=jnp.float32)        # ChebConv bias init
    gamma = jnp.ones((Cout,), dtype=jnp.float32)             # BatchNorm1d default weight
    beta = jnp.zeros((Cout,), dtype=jnp.float32)             # BatchNorm1d default bias

    # Default bt=B -> nb == 1 -> fused single-kernel path (the right choice at this size).
    out = jax.jit(spherical_cheb_pool)(x, lap, weight, bias, gamma, beta)
    out = jax.block_until_ready(out)

    assert out.shape == (B, Vp, Cout), out.shape
    assert bool(jnp.all(jnp.isfinite(out)))

    # Loose tolerance: the kernel uses bf16 MXU inputs and a bf16 Chebyshev state.
    ref = _reference(x, lap, weight, bias, gamma, beta)
    assert bool(jnp.allclose(out, ref, atol=1e-1, rtol=1e-1)), \
        float(jnp.max(jnp.abs(out - ref)))

    print("KERNEL_OK")
</pallas_src>

<mosaic_0001>
module attributes {stable_mosaic.version = 11 : i64} {
  func.func @_pool_cheb_bn_elu_kernel(%arg0: i32, %arg1: memref<32x16xf32, #tpu.memory_space<vmem>>, %arg2: memref<16x16xbf16, #tpu.memory_space<vmem>>, %arg3: memref<12x8xbf16, #tpu.memory_space<vmem>>, %arg4: memref<1x8xf32, #tpu.memory_space<vmem>>, %arg5: memref<1x8xf32, #tpu.memory_space<vmem>>, %arg6: memref<1x8xf32, #tpu.memory_space<vmem>>, %arg7: memref<32x8xf32, #tpu.memory_space<vmem>>) attributes {dimension_semantics = [#tpu.dimension_semantics<parallel>], iteration_bounds = array<i64: 1>, scalar_prefetch = 0 : i64, scratch_operands = 0 : i64, tpu.core_type = #tpu.core_type<tc>, window_params = [{transform_indices = @transform_0, window_bounds = array<i64: 32, 16>}, {pipeline_mode = #tpu.pipeline_mode<synchronous>, transform_indices = @transform_1, window_bounds = array<i64: 16, 16>}, {pipeline_mode = #tpu.pipeline_mode<synchronous>, transform_indices = @transform_2, window_bounds = array<i64: 12, 8>}, {pipeline_mode = #tpu.pipeline_mode<synchronous>, transform_indices = @transform_3, window_bounds = array<i64: 1, 8>}, {pipeline_mode = #tpu.pipeline_mode<synchronous>, transform_indices = @transform_4, window_bounds = array<i64: 1, 8>}, {pipeline_mode = #tpu.pipeline_mode<synchronous>, transform_indices = @transform_5, window_bounds = array<i64: 1, 8>}, {transform_indices = @transform_6, window_bounds = array<i64: 32, 8>}]} {
    %c0 = arith.constant 0 : index
    %c0_0 = arith.constant 0 : index
    %0 = vector.load %arg1[%c0, %c0_0] : memref<32x16xf32, #tpu.memory_space<vmem>>, vector<32x16xf32>
    %1 = vector.extract_strided_slice %0 {offsets = [0, 0], sizes = [32, 4], strides = [1, 1]} : vector<32x16xf32> to vector<32x4xf32>
    %2 = vector.extract_strided_slice %0 {offsets = [0, 4], sizes = [32, 4], strides = [1, 1]} : vector<32x16xf32> to vector<32x4xf32>
    %3 = arith.maximumf %1, %2 : vector<32x4xf32>
    %4 = vector.extract_strided_slice %0 {offsets = [0, 8], sizes = [32, 4], strides = [1, 1]} : vector<32x16xf32> to vector<32x4xf32>
    %5 = arith.maximumf %3, %4 : vector<32x4xf32>
    %6 = vector.extract_strided_slice %0 {offsets = [0, 12], sizes = [32, 4], strides = [1, 1]} : vector<32x16xf32> to vector<32x4xf32>
    %7 = arith.maximumf %5, %6 : vector<32x4xf32>
    %8 = arith.truncf %7 : vector<32x4xf32> to vector<32x4xbf16>
    %9 = vector.extract_strided_slice %8 {offsets = [0, 0], sizes = [16, 4], strides = [1, 1]} : vector<32x4xbf16> to vector<16x4xbf16>
    %10 = vector.extract_strided_slice %8 {offsets = [16, 0], sizes = [16, 4], strides = [1, 1]} : vector<32x4xbf16> to vector<16x4xbf16>
    %11 = tpu.concatenate %9, %10 in 1 : vector<16x4xbf16>, vector<16x4xbf16> -> vector<16x8xbf16>
    %c0_1 = arith.constant 0 : index
    %c0_2 = arith.constant 0 : index
    %12 = vector.load %arg2[%c0_1, %c0_2] : memref<16x16xbf16, #tpu.memory_space<vmem>>, vector<16x16xbf16>
    %cst = arith.constant dense<0.000000e+00> : vector<16x8xf32>
    %13 = tpu.matmul %12, %11, %cst {dimension_numbers = #tpu.dot_dimension_numbers<[1], [0], [0], [1], [0, 0, 1, 1], [], []>} : vector<16x16xbf16>, vector<16x8xbf16>, vector<16x8xf32> -> vector<16x8xf32>
    %14 = arith.truncf %13 : vector<16x8xf32> to vector<16x8xbf16>
    %cst_3 = arith.constant dense<0.000000e+00> : vector<16x8xf32>
    %15 = tpu.matmul %12, %14, %cst_3 {dimension_numbers = #tpu.dot_dimension_numbers<[1], [0], [0], [1], [0, 0, 1, 1], [], []>} : vector<16x16xbf16>, vector<16x8xbf16>, vector<16x8xf32> -> vector<16x8xf32>
    %cst_4 = arith.constant 2.000000e+00 : f32
    %16 = vector.broadcast %cst_4 : f32 to vector<16x8xf32>
    %17 = arith.mulf %16, %15 : vector<16x8xf32>
    %18 = arith.extf %11 : vector<16x8xbf16> to vector<16x8xf32>
    %19 = arith.subf %17, %18 : vector<16x8xf32>
    %20 = arith.truncf %19 : vector<16x8xf32> to vector<16x8xbf16>
    %21 = vector.extract_strided_slice %11 {offsets = [0, 0], sizes = [16, 4], strides = [1, 1]} : vector<16x8xbf16> to vector<16x4xbf16>
    %22 = vector.extract_strided_slice %11 {offsets = [0, 4], sizes = [16, 4], strides = [1, 1]} : vector<16x8xbf16> to vector<16x4xbf16>
    %23 = tpu.concatenate %21, %22 in 0 : vector<16x4xbf16>, vector<16x4xbf16> -> vector<32x4xbf16>
    %24 = vector.extract_strided_slice %14 {offsets = [0, 0], sizes = [16, 4], strides = [1, 1]} : vector<16x8xbf16> to vector<16x4xbf16>
    %25 = vector.extract_strided_slice %14 {offsets = [0, 4], sizes = [16, 4], strides = [1, 1]} : vector<16x8xbf16> to vector<16x4xbf16>
    %26 = tpu.concatenate %24, %25 in 0 : vector<16x4xbf16>, vector<16x4xbf16> -> vector<32x4xbf16>
    %27 = vector.extract_strided_slice %20 {offsets = [0, 0], sizes = [16, 4], strides = [1, 1]} : vector<16x8xbf16> to vector<16x4xbf16>
    %28 = vector.extract_strided_slice %20 {offsets = [0, 4], sizes = [16, 4], strides = [1, 1]} : vector<16x8xbf16> to vector<16x4xbf16>
    %29 = tpu.concatenate %27, %28 in 0 : vector<16x4xbf16>, vector<16x4xbf16> -> vector<32x4xbf16>
    %30 = tpu.concatenate %23, %26, %29 in 1 : vector<32x4xbf16>, vector<32x4xbf16>, vector<32x4xbf16> -> vector<32x12xbf16>
    %c0_5 = arith.constant 0 : index
    %c0_6 = arith.constant 0 : index
    %31 = vector.load %arg3[%c0_5, %c0_6] : memref<12x8xbf16, #tpu.memory_space<vmem>>, vector<12x8xbf16>
    %cst_7 = arith.constant dense<0.000000e+00> : vector<32x8xf32>
    %32 = tpu.matmul %30, %31, %cst_7 {dimension_numbers = #tpu.dot_dimension_numbers<[1], [0], [0], [1], [0, 0, 1, 1], [], []>} : vector<32x12xbf16>, vector<12x8xbf16>, vector<32x8xf32> -> vector<32x8xf32>
    %c0_8 = arith.constant 0 : index
    %c0_9 = arith.constant 0 : index
    %33 = vector.load %arg4[%c0_8, %c0_9] : memref<1x8xf32, #tpu.memory_space<vmem>>, vector<1x8xf32>
    %34 = vector.broadcast %33 : vector<1x8xf32> to vector<32x8xf32>
    %35 = arith.addf %32, %34 : vector<32x8xf32>
    %cst_10 = arith.constant dense<0.000000e+00> : vector<8xf32>
    %36 = vector.multi_reduction <add>, %35, %cst_10 [0] : vector<32x8xf32> to vector<8xf32>
    %37 = vector.shape_cast %36 : vector<8xf32> to vector<1x8xf32>
    %cst_11 = arith.constant 3.125000e-02 : f32
    %38 = vector.broadcast %cst_11 : f32 to vector<1x8xf32>
    %39 = arith.mulf %37, %38 : vector<1x8xf32>
    %40 = vector.broadcast %39 : vector<1x8xf32> to vector<32x8xf32>
    %41 = arith.subf %35, %40 : vector<32x8xf32>
    %42 = arith.mulf %41, %41 : vector<32x8xf32>
    %cst_12 = arith.constant dense<0.000000e+00> : vector<8xf32>
    %43 = vector.multi_reduction <add>, %42, %cst_12 [0] : vector<32x8xf32> to vector<8xf32>
    %44 = vector.shape_cast %43 : vector<8xf32> to vector<1x8xf32>
    %cst_13 = arith.constant 3.125000e-02 : f32
    %45 = vector.broadcast %cst_13 : f32 to vector<1x8xf32>
    %46 = arith.mulf %44, %45 : vector<1x8xf32>
    %c0_14 = arith.constant 0 : index
    %c0_15 = arith.constant 0 : index
    %47 = vector.load %arg5[%c0_14, %c0_15] : memref<1x8xf32, #tpu.memory_space<vmem>>, vector<1x8xf32>
    %cst_16 = arith.constant 9.99999974E-6 : f32
    %48 = vector.broadcast %cst_16 : f32 to vector<1x8xf32>
    %49 = arith.addf %46, %48 : vector<1x8xf32>
    %50 = math.rsqrt %49 : vector<1x8xf32>
    %51 = arith.mulf %47, %50 : vector<1x8xf32>
    %52 = vector.broadcast %51 : vector<1x8xf32> to vector<32x8xf32>
    %53 = arith.mulf %41, %52 : vector<32x8xf32>
    %c0_17 = arith.constant 0 : index
    %c0_18 = arith.constant 0 : index
    %54 = vector.load %arg6[%c0_17, %c0_18] : memref<1x8xf32, #tpu.memory_space<vmem>>, vector<1x8xf32>
    %55 = vector.broadcast %54 : vector<1x8xf32> to vector<32x8xf32>
    %56 = arith.addf %53, %55 : vector<32x8xf32>
    %cst_19 = arith.constant 0.000000e+00 : f32
    %57 = vector.broadcast %cst_19 : f32 to vector<32x8xf32>
    %58 = arith.cmpf ogt, %56, %57 : vector<32x8xf32>
    %cst_20 = arith.constant 0.000000e+00 : f32
    %59 = vector.broadcast %cst_20 : f32 to vector<32x8xf32>
    %60 = arith.minimumf %56, %59 : vector<32x8xf32>
    %61 = math.exp %60 : vector<32x8xf32>
    %cst_21 = arith.constant 1.000000e+00 : f32
    %62 = vector.broadcast %cst_21 : f32 to vector<32x8xf32>
    %63 = arith.subf %61, %62 : vector<32x8xf32>
    %64 = arith.select %58, %56, %63 : vector<32x8xi1>, vector<32x8xf32>
    %c0_22 = arith.constant 0 : index
    %c0_23 = arith.constant 0 : index
    %65 = vector.load %arg7[%c0_22, %c0_23] : memref<32x8xf32, #tpu.memory_space<vmem>>, vector<32x8xf32>
    tpu.vector_store %arg7[%c0_22, %c0_23], %64 {strides = array<i32>} : memref<32x8xf32, #tpu.memory_space<vmem>>, vector<32x8xf32>,
    return
  }
  func.func @transform_0(%arg0: i32) -> (i32, i32) {
    %c0_i32 = arith.constant 0 : i32
    %c0_i32_0 = arith.constant 0 : i32
    return %arg0, %c0_i32 : i32, i32
  }
  func.func @transform_1(%arg0: i32) -> (i32, i32) {
    %c0_i32 = arith.constant 0 : i32
    %c0_i32_0 = arith.constant 0 : i32
    %c0_i32_1 = arith.constant 0 : i32
    return %c0_i32, %c0_i32_0 : i32, i32
  }
  func.func @transform_2(%arg0: i32) -> (i32, i32) {
    %c0_i32 = arith.constant 0 : i32
    %c0_i32_0 = arith.constant 0 : i32
    %c0_i32_1 = arith.constant 0 : i32
    return %c0_i32, %c0_i32_0 : i32, i32
  }
  func.func @transform_3(%arg0: i32) -> (i32, i32) {
    %c0_i32 = arith.constant 0 : i32
    %c0_i32_0 = arith.constant 0 : i32
    %c0_i32_1 = arith.constant 0 : i32
    return %c0_i32, %c0_i32_0 : i32, i32
  }
  func.func @transform_4(%arg0: i32) -> (i32, i32) {
    %c0_i32 = arith.constant 0 : i32
    %c0_i32_0 = arith.constant 0 : i32
    %c0_i32_1 = arith.constant 0 : i32
    return %c0_i32, %c0_i32_0 : i32, i32
  }
  func.func @transform_5(%arg0: i32) -> (i32, i32) {
    %c0_i32 = arith.constant 0 : i32
    %c0_i32_0 = arith.constant 0 : i32
    %c0_i32_1 = arith.constant 0 : i32
    return %c0_i32, %c0_i32_0 : i32, i32
  }
  func.func @transform_6(%arg0: i32) -> (i32, i32) {
    %c0_i32 = arith.constant 0 : i32
    %c0_i32_0 = arith.constant 0 : i32
    return %arg0, %c0_i32 : i32, i32
  }
}

</mosaic_0001>

<llo_original>
// kernel: spherical_cheb_pool.1
$region0: #{spherical_cheb_pool.1}
  #allocation0 [shape = 'u32[]', space=smem, size = 0x4, offset = 0x4, fixed_abs, tag = 'smem constant byte address 0x4 - core index']
  #allocation1 [shape = 'u32[144,128]{1,0:T(1,128)}', space=vmem, size = 0x12000, scoped, tag = 'internal scratch']
  %s0 = inlined_call_operand.hbm [shape: f32[32,16], index: 0, kind: input, shape index: {}]
  %s1 = inlined_call_operand.hbm [shape: bf16[16,16], index: 1, kind: input, shape index: {}]
  %s2 = inlined_call_operand.hbm [shape: bf16[12,8], index: 2, kind: input, shape index: {}]
  %s3 = inlined_call_operand.hbm [shape: f32[1,8], index: 3, kind: input, shape index: {}]
  %s4 = inlined_call_operand.hbm [shape: f32[1,8], index: 4, kind: input, shape index: {}]
  %s5 = inlined_call_operand.hbm [shape: f32[1,8], index: 5, kind: input, shape index: {}]
  %s6 = inlined_call_operand.hbm [shape: f32[32,8], index: 6, kind: output, shape index: {}]
  %s7 = sld [smem:[#allocation0]]
  $region58: #{spherical_cheb_pool.1} parent=0
    _
  %s9 = ssub.s32 1, %s7
  %s10 = scalar_select 0, %s9, %s7
  $region1: #{spherical_cheb_pool.1} parent=0
    #allocation2 [shape = 'u8[16384]{0}', space=vmem, size = 0x4000, scoped, tag = 'input window, operand 0, single buffered']
    #allocation3 [shape = 's32[1]{0}', space=sflag, size = 0x4, scoped, tag = 'scoped memory for spherical_cheb_pool.1']
    #allocation4 [shape = 's32[1]{0}', space=sflag, size = 0x4, scoped, tag = 'scoped memory for spherical_cheb_pool.1']
    #allocation5 [shape = 'u8[4096]{0}', space=vmem, size = 0x1000, scoped, tag = 'input window, operand 1, single buffered']
    #allocation6 [shape = 's32[1]{0}', space=sflag, size = 0x4, scoped, tag = 'scoped memory for spherical_cheb_pool.1']
    #allocation7 [shape = 'u8[4096]{0}', space=vmem, size = 0x1000, scoped, tag = 'input window, operand 2, single buffered']
    #allocation8 [shape = 'u8[512]{0}', space=vmem, size = 0x400, scoped, tag = 'input window, operand 3, single buffered']
    #allocation9 [shape = 's32[1]{0}', space=sflag, size = 0x4, scoped, tag = 'scoped memory for spherical_cheb_pool.1']
    #allocation10 [shape = 'u8[512]{0}', space=vmem, size = 0x400, scoped, tag = 'input window, operand 4, single buffered']
    #allocation11 [shape = 'u8[512]{0}', space=vmem, size = 0x400, scoped, tag = 'input window, operand 5, single buffered']
    #allocation12 [shape = 's32[1]{0}', space=sflag, size = 0x4, scoped, tag = 'scoped memory for spherical_cheb_pool.1']
    #allocation13 [shape = 'u8[16384]{0}', space=vmem, size = 0x4000, scoped, tag = 'output window, operand 0, single buffered']
    %11 = vsyncpa [#allocation3], 0
    %12 = vsyncpa [#allocation6], 0
    %13 = vsyncpa [#allocation9], 0
    %14 = vsyncpa [#allocation12], 0
    %15 = vsyncpa [#allocation4], 0
    // Predicated region
    $region2: #{spherical_cheb_pool.1} parent=1 // pred_check
      _
    $region3: #{spherical_cheb_pool.1} parent=1 // pred_check_branch
      %17 = sbr.rel (0) target = $region5
    $region4: #{spherical_cheb_pool.1} parent=1 // pred_region
      %s19 = ssub.s32 512, 512
      %20 = vsyncadd [#allocation3], %s19
      %s21 = sshll.u32 [#allocation2], 4
      %s22 = int_to_ptr.vmem [resolvable:$true] %s21
      %27 = dma.hbm_to_vmem [thread:$0]  %s0, 512, %s22, [#allocation3], 128, 128, 8
    $region5: #{spherical_cheb_pool.1} parent=1 // pred_fallthru
      _
    // Predicated region
    $region6: #{spherical_cheb_pool.1} parent=1 // pred_check
      _
    $region7: #{spherical_cheb_pool.1} parent=1 // pred_check_branch
      %29 = sbr.rel (0) target = $region9
    $region8: #{spherical_cheb_pool.1} parent=1 // pred_region
      %s31 = ssub.s32 128, 128
      %32 = vsyncadd [#allocation6], %s31
      %s33 = sshll.u32 [#allocation5], 4
      %s34 = int_to_ptr.vmem [resolvable:$true] %s33
      %39 = dma.hbm_to_vmem [thread:$0]  %s1, 128, %s34, [#allocation6], 64, 64, 4
    $region9: #{spherical_cheb_pool.1} parent=1 // pred_fallthru
      _
    // Predicated region
    $region10: #{spherical_cheb_pool.1} parent=1 // pred_check
      _
    $region11: #{spherical_cheb_pool.1} parent=1 // pred_check_branch
      %41 = sbr.rel (0) target = $region13
    $region12: #{spherical_cheb_pool.1} parent=1 // pred_region
      %s43 = ssub.s32 128, 128
      %44 = vsyncadd [#allocation6], %s43
      %s45 = sshll.u32 [#allocation7], 4
      %s46 = int_to_ptr.vmem [resolvable:$true] %s45
      %51 = dma.hbm_to_vmem [thread:$0]  %s2, 128, %s46, [#allocation6], 64, 64, 4
    $region13: #{spherical_cheb_pool.1} parent=1 // pred_fallthru
      _
    // Predicated region
    $region14: #{spherical_cheb_pool.1} parent=1 // pred_check
      _
    $region15: #{spherical_cheb_pool.1} parent=1 // pred_check_branch
      %53 = sbr.rel (0) target = $region17
    $region16: #{spherical_cheb_pool.1} parent=1 // pred_region
      %s55 = ssub.s32 16, 16
      %56 = vsyncadd [#allocation9], %s55
      %s58 = sshll.u32 [#allocation8], 4
      %s59 = int_to_ptr.vmem [resolvable:$true] %s58
      %61 = dma.hbm_to_vmem [thread:$0]  %s3, 16, %s59, [#allocation9]
    $region17: #{spherical_cheb_pool.1} parent=1 // pred_fallthru
      _
    // Predicated region
    $region18: #{spherical_cheb_pool.1} parent=1 // pred_check
      _
    $region19: #{spherical_cheb_pool.1} parent=1 // pred_check_branch
      %63 = sbr.rel (0) target = $region21
    $region20: #{spherical_cheb_pool.1} parent=1 // pred_region
      %s65 = ssub.s32 16, 16
      %66 = vsyncadd [#allocation9], %s65
      %s68 = sshll.u32 [#allocation10], 4
      %s69 = int_to_ptr.vmem [resolvable:$true] %s68
      %71 = dma.hbm_to_vmem [thread:$0]  %s4, 16, %s69, [#allocation9]
    $region21: #{spherical_cheb_pool.1} parent=1 // pred_fallthru
      _
    // Predicated region
    $region22: #{spherical_cheb_pool.1} parent=1 // pred_check
      _
    $region23: #{spherical_cheb_pool.1} parent=1 // pred_check_branch
      %73 = sbr.rel (0) target = $region25
    $region24: #{spherical_cheb_pool.1} parent=1 // pred_region
      %s75 = ssub.s32 16, 16
      %76 = vsyncadd [#allocation12], %s75
      %s78 = sshll.u32 [#allocation11], 4
      %s79 = int_to_ptr.vmem [resolvable:$true] %s78
      %81 = dma.hbm_to_vmem [thread:$0]  %s5, 16, %s79, [#allocation12]
    $region25: #{spherical_cheb_pool.1} parent=1 // pred_fallthru
      _
    // Predicated region
    $region26: #{spherical_cheb_pool.1} parent=1 // pred_check
      _
    $region27: #{spherical_cheb_pool.1} parent=1 // pred_check_branch
      %83 = sbr.rel (0) target = $region29
    $region28: #{spherical_cheb_pool.1} parent=1 // pred_region
      %84 = dma.done [#allocation3], 512
    $region29: #{spherical_cheb_pool.1} parent=1 // pred_fallthru
      _
    // Predicated region
    $region30: #{spherical_cheb_pool.1} parent=1 // pred_check
      _
    $region31: #{spherical_cheb_pool.1} parent=1 // pred_check_branch
      %86 = sbr.rel (0) target = $region33
    $region32: #{spherical_cheb_pool.1} parent=1 // pred_region
      %87 = dma.done [#allocation6], 128
    $region33: #{spherical_cheb_pool.1} parent=1 // pred_fallthru
      _
    // Predicated region
    $region34: #{spherical_cheb_pool.1} parent=1 // pred_check
      _
    $region35: #{spherical_cheb_pool.1} parent=1 // pred_check_branch
      %89 = sbr.rel (0) target = $region37
    $region36: #{spherical_cheb_pool.1} parent=1 // pred_region
      %90 = dma.done [#allocation6], 128
    $region37: #{spherical_cheb_pool.1} parent=1 // pred_fallthru
      _
    // Predicated region
    $region38: #{spherical_cheb_pool.1} parent=1 // pred_check
      _
    $region39: #{spherical_cheb_pool.1} parent=1 // pred_check_branch
      %92 = sbr.rel (0) target = $region41
    $region40: #{spherical_cheb_pool.1} parent=1 // pred_region
      %93 = dma.done [#allocation9], 16
    $region41: #{spherical_cheb_pool.1} parent=1 // pred_fallthru
      _
    // Predicated region
    $region42: #{spherical_cheb_pool.1} parent=1 // pred_check
      _
    $region43: #{spherical_cheb_pool.1} parent=1 // pred_check_branch
      %95 = sbr.rel (0) target = $region45
    $region44: #{spherical_cheb_pool.1} parent=1 // pred_region
      %96 = dma.done [#allocation9], 16
    $region45: #{spherical_cheb_pool.1} parent=1 // pred_fallthru
      _
    // Predicated region
    $region46: #{spherical_cheb_pool.1} parent=1 // pred_check
      _
    $region47: #{spherical_cheb_pool.1} parent=1 // pred_check_branch
      %98 = sbr.rel (0) target = $region49
    $region48: #{spherical_cheb_pool.1} parent=1 // pred_region
      %99 = dma.done [#allocation12], 16
    $region49: #{spherical_cheb_pool.1} parent=1 // pred_fallthru
      _
    %v101 = vld [vmem:[#allocation2] sm:$0xff]
    %v102 = vld [vmem:[#allocation2 + $0x8] sm:$0xff]
    %v103 = vld [vmem:[#allocation2 + $0x10] sm:$0xff]
    %v104 = vld [vmem:[#allocation2 + $0x18] sm:$0xff]
    %109 = vrot.lane.b32.xlu0 %v101, 124
    %v110 = vpop.permute.xlu0 %109
    %111 = vrot.lane.b32.xlu0 %v102, 124
    %v112 = vpop.permute.xlu0 %111
    %113 = vrot.lane.b32.xlu0 %v103, 124
    %v114 = vpop.permute.xlu0 %113
    %115 = vrot.lane.b32.xlu0 %v104, 124
    %v116 = vpop.permute.xlu0 %115
    %v121 = vmax.f32 %v101, %v110
    %v122 = vmax.f32 %v102, %v112
    %v123 = vmax.f32 %v103, %v114
    %v124 = vmax.f32 %v104, %v116
    %125 = vrot.lane.b32.xlu0 %v101, 120
    %v126 = vpop.permute.xlu0 %125
    %127 = vrot.lane.b32.xlu0 %v102, 120
    %v128 = vpop.permute.xlu0 %127
    %129 = vrot.lane.b32.xlu0 %v103, 120
    %v130 = vpop.permute.xlu0 %129
    %131 = vrot.lane.b32.xlu0 %v104, 120
    %v132 = vpop.permute.xlu0 %131
    %v137 = vmax.f32 %v121, %v126
    %v138 = vmax.f32 %v122, %v128
    %v139 = vmax.f32 %v123, %v130
    %v140 = vmax.f32 %v124, %v132
    %141 = vrot.lane.b32.xlu0 %v101, 116
    %v142 = vpop.permute.xlu0 %141
    %143 = vrot.lane.b32.xlu0 %v102, 116
    %v144 = vpop.permute.xlu0 %143
    %145 = vrot.lane.b32.xlu0 %v103, 116
    %v146 = vpop.permute.xlu0 %145
    %147 = vrot.lane.b32.xlu0 %v104, 116
    %v148 = vpop.permute.xlu0 %147
    %v153 = vmax.f32 %v137, %v142
    %v154 = vmax.f32 %v138, %v144
    %v155 = vmax.f32 %v139, %v146
    %v156 = vmax.f32 %v140, %v148
    %v157 = vpack.c.bf16 %v154, %v153
    %v158 = vpack.c.bf16 %v156, %v155
    %160 = vrot.lane.b32.xlu0 %v158, 4
    %v161 = vpop.permute.xlu0 %160
    %vm162 = vcmask 31744
    %v165 = vsel %vm162, %v157, %v161
    %v167 = vld [vmem:[#allocation5] sm:$0xf]
    %v168 = vld [vmem:[#allocation5 + $0x4] sm:$0xf]
    %v171 = vunpack.c.l.b16 %v167
    %v172 = vunpack.c.l.b16 %v168
    %v173 = vpack.c.b16 %v172, %v171
    %vm174 = vcmask 130048
    %v176 = vsel %vm174, %v173, 0
    %178 = vmatprep.subr.bf16.mxu0 0
    %179 = vmatpush1.bf16.msra.mxu0 %v165
    %180 = vmatprep.subr.bf16.mxu0 0
    %181 = vmatpush1.bf16.msra.mxu0 0
    %182 = vmatprep.subr.bf16.mxu0 0
    %183 = vmatpush1.bf16.msra.mxu0 0
    %184 = vmatprep.subr.bf16.mxu0 0
    %185 = vmatpush1.bf16.msra.mxu0 0
    %186 = vmatprep.subr.bf16.mxu0 0
    %187 = vmatpush1.bf16.msra.mxu0 0
    %188 = vmatprep.subr.bf16.mxu0 0
    %189 = vmatpush1.bf16.msra.mxu0 0
    %190 = vmatprep.subr.bf16.mxu0 0
    %191 = vmatpush1.bf16.msra.mxu0 0
    %192 = vmatprep.subr.bf16.mxu0 0
    %193 = vmatpush1.bf16.msra.mxu0 0
    %194 = vmatprep.subr.bf16.mxu0 0
    %195 = vmatpush1.bf16.msra.mxu0 0
    %196 = vmatprep.subr.bf16.mxu0 0
    %197 = vmatpush1.bf16.msra.mxu0 0
    %198 = vmatprep.subr.bf16.mxu0 0
    %199 = vmatpush1.bf16.msra.mxu0 0
    %200 = vmatprep.subr.bf16.mxu0 0
    %201 = vmatpush1.bf16.msra.mxu0 0
    %202 = vmatprep.subr.bf16.mxu0 0
    %203 = vmatpush1.bf16.msra.mxu0 0
    %204 = vmatprep.subr.bf16.mxu0 0
    %205 = vmatpush1.bf16.msra.mxu0 0
    %206 = vmatprep.subr.bf16.mxu0 0
    %207 = vmatpush1.bf16.msra.mxu0 0
    %208 = vmatprep.subr.bf16.mxu0 0
    %209 = vmatpush1.bf16.msra.mxu0 0
    %210 = vmatprep.mubr.bf16.mxu0 0
    %211 = vmatmul.mubr.bf16.gmra.mrb[0].mxu0 %v176
    %v212 = vpop.f32.mrb[0].mxu0
    %v213 = vadd.f32 0.0, %v212
    %v214 = vpop.f32.mrb[0].mxu0
    %v215 = vpop.f32.mrb[0].mxu0
    %v216 = vadd.f32 0.0, %v215
    %v217 = vpop.f32.mrb[0].mxu0
    %218 = vdwg.mxu0
    %v219 = vpack.c.bf16 %v216, %v213
    %220 = vmatprep.subr.bf16.mxu0 0
    %221 = vmatpush1.bf16.msra.mxu0 %v219
    %222 = vmatprep.subr.bf16.mxu0 0
    %223 = vmatpush1.bf16.msra.mxu0 0
    %224 = vmatprep.subr.bf16.mxu0 0
    %225 = vmatpush1.bf16.msra.mxu0 0
    %226 = vmatprep.subr.bf16.mxu0 0
    %227 = vmatpush1.bf16.msra.mxu0 0
    %228 = vmatprep.subr.bf16.mxu0 0
    %229 = vmatpush1.bf16.msra.mxu0 0
    %230 = vmatprep.subr.bf16.mxu0 0
    %231 = vmatpush1.bf16.msra.mxu0 0
    %232 = vmatprep.subr.bf16.mxu0 0
    %233 = vmatpush1.bf16.msra.mxu0 0
    %234 = vmatprep.subr.bf16.mxu0 0
    %235 = vmatpush1.bf16.msra.mxu0 0
    %236 = vmatprep.subr.bf16.mxu0 0
    %237 = vmatpush1.bf16.msra.mxu0 0
    %238 = vmatprep.subr.bf16.mxu0 0
    %239 = vmatpush1.bf16.msra.mxu0 0
    %240 = vmatprep.subr.bf16.mxu0 0
    %241 = vmatpush1.bf16.msra.mxu0 0
    %242 = vmatprep.subr.bf16.mxu0 0
    %243 = vmatpush1.bf16.msra.mxu0 0
    %244 = vmatprep.subr.bf16.mxu0 0
    %245 = vmatpush1.bf16.msra.mxu0 0
    %246 = vmatprep.subr.bf16.mxu0 0
    %247 = vmatpush1.bf16.msra.mxu0 0
    %248 = vmatprep.subr.bf16.mxu0 0
    %249 = vmatpush1.bf16.msra.mxu0 0
    %250 = vmatprep.subr.bf16.mxu0 0
    %251 = vmatpush1.bf16.msra.mxu0 0
    %252 = vmatprep.mubr.bf16.mxu0 0
    %253 = vmatmul.mubr.bf16.gmra.mrb[0].mxu0 %v176
    %v254 = vpop.f32.mrb[0].mxu0
    %v255 = vadd.f32 0.0, %v254
    %v256 = vpop.f32.mrb[0].mxu0
    %v257 = vpop.f32.mrb[0].mxu0
    %v258 = vadd.f32 0.0, %v257
    %v259 = vpop.f32.mrb[0].mxu0
    %260 = vdwg.mxu0
    %v261 = vmul.f32 %v255, 2.0
    %v262 = vmul.f32 %v258, 2.0
    %v263 = vunpack.c.l.bf16 %v165
    %v264 = vunpack.c.h.bf16 %v165
    %v265 = vsub.f32 %v261, %v263
    %v266 = vsub.f32 %v262, %v264
    %v267 = vpack.c.bf16 %v266, %v265
    %269 = vrot.lane.b32.xlu0 %v165, 124
    %v270 = vpop.permute.xlu0 %269
    %272 = vrot.lane.b32.xlu0 %v219, 124
    %v273 = vpop.permute.xlu0 %272
    %275 = vrot.lane.b32.xlu0 %v267, 124
    %v276 = vpop.permute.xlu0 %275
    %277 = vrot.lane.b32.xlu0 %v219, 4
    %v278 = vpop.permute.xlu0 %277
    %279 = vrot.lane.b32.xlu0 %v273, 4
    %v280 = vpop.permute.xlu0 %279
    %281 = vrot.lane.b32.xlu0 %v267, 8
    %v282 = vpop.permute.xlu0 %281
    %283 = vrot.lane.b32.xlu0 %v276, 8
    %v284 = vpop.permute.xlu0 %283
    %v286 = vsel %vm162, %v165, %v278
    %v289 = vsel %vm162, %v270, %v280
    %vm290 = vcmask 64512
    %v292 = vsel %vm290, %v286, %v282
    %v294 = vsel %vm290, %v289, %v284
    %v295 = vld [vmem:[#allocation7] sm:$0xf]
    %v296 = vld [vmem:[#allocation7 + $0x4] sm:$0x3]
    %v297 = vld [vmem:[#allocation8] sm:$0x1]
    %v299 = vlaneseq
    %v300 = vshrl.u32 %v299, 7
    %v301 = vsub.s32 0, %v300
    %v302 = vrot.slane %v297, %v301
    %v306 = vunpack.c.l.b16 %v295
    %v307 = vunpack.c.l.b16 %v296
    %v308 = vpack.c.b16 %v307, %v306
    %vm309 = vcmask 97280
    %v310 = vsel %vm309, %v292, 0
    %v312 = vsel %vm309, %v294, 0
    %vm314 = vcmask 1045504
    %v316 = vsel %vm314, %v308, 0
    %318 = vmatprep.subr.bf16.mxu0 0
    %319 = vmatpush1.bf16.msra.mxu0 %v316
    %320 = vmatprep.subr.bf16.mxu0 0
    %321 = vmatpush1.bf16.msra.mxu0 0
    %322 = vmatprep.subr.bf16.mxu0 0
    %323 = vmatpush1.bf16.msra.mxu0 0
    %324 = vmatprep.subr.bf16.mxu0 0
    %325 = vmatpush1.bf16.msra.mxu0 0
    %326 = vmatprep.subr.bf16.mxu0 0
    %327 = vmatpush1.bf16.msra.mxu0 0
    %328 = vmatprep.subr.bf16.mxu0 0
    %329 = vmatpush1.bf16.msra.mxu0 0
    %330 = vmatprep.subr.bf16.mxu0 0
    %331 = vmatpush1.bf16.msra.mxu0 0
    %332 = vmatprep.subr.bf16.mxu0 0
    %333 = vmatpush1.bf16.msra.mxu0 0
    %334 = vmatprep.subr.bf16.mxu0 0
    %335 = vmatpush1.bf16.msra.mxu0 0
    %336 = vmatprep.subr.bf16.mxu0 0
    %337 = vmatpush1.bf16.msra.mxu0 0
    %338 = vmatprep.subr.bf16.mxu0 0
    %339 = vmatpush1.bf16.msra.mxu0 0
    %340 = vmatprep.subr.bf16.mxu0 0
    %341 = vmatpush1.bf16.msra.mxu0 0
    %342 = vmatprep.subr.bf16.mxu0 0
    %343 = vmatpush1.bf16.msra.mxu0 0
    %344 = vmatprep.subr.bf16.mxu0 0
    %345 = vmatpush1.bf16.msra.mxu0 0
    %346 = vmatprep.subr.bf16.mxu0 0
    %347 = vmatpush1.bf16.msra.mxu0 0
    %348 = vmatprep.subr.bf16.mxu0 0
    %349 = vmatpush1.bf16.msra.mxu0 0
    %350 = vmatprep.mubr.bf16.mxu0 0
    %351 = vmatmul.mubr.bf16.gmra.mrb[0].mxu0 %v310
    %v352 = vpop.f32.mrb[0].mxu0
    %v353 = vadd.f32 %v302, %v352
    %v354 = vpop.f32.mrb[0].mxu0
    %v355 = vpop.f32.mrb[0].mxu0
    %v356 = vadd.f32 %v302, %v355
    %v357 = vpop.f32.mrb[0].mxu0
    %358 = vmatprep.mubr.bf16.mxu0 0
    %359 = vmatmul.mubr.bf16.gmra.mrb[0].mxu0 %v312
    %v360 = vpop.f32.mrb[0].mxu0
    %v361 = vadd.f32 %v302, %v360
    %v362 = vpop.f32.mrb[0].mxu0
    %v363 = vpop.f32.mrb[0].mxu0
    %v364 = vadd.f32 %v302, %v363
    %v365 = vpop.f32.mrb[0].mxu0
    %366 = vdwg.mxu0
    %v367 = vsel %vm290, %v353, 0.0
    %v368 = vsel %vm290, %v356, 0.0
    %v369 = vadd.f32 %v367, %v368
    %v370 = vsel %vm290, %v361, 0.0
    %v371 = vadd.f32 %v369, %v370
    %v372 = vsel %vm290, %v364, 0.0
    %v373 = vadd.f32 %v371, %v372
    %v374 = vrot.slane %v373, 4
    %v375 = vadd.f32 %v373, %v374
    %v376 = vrot.slane %v375, 2
    %v377 = vadd.f32 %v375, %v376
    %v378 = vrot.slane %v377, 1
    %v379 = vadd.f32 %v377, %v378
    %v380 = vmul.f32 %v379, 0.03125
    %v381 = vsub.f32 %v353, %v380
    %v382 = vsub.f32 %v356, %v380
    %v383 = vsub.f32 %v361, %v380
    %v384 = vsub.f32 %v364, %v380
    %v385 = vmul.f32 %v381, %v381
    %v386 = vmul.f32 %v382, %v382
    %v387 = vmul.f32 %v383, %v383
    %v388 = vmul.f32 %v384, %v384
    %v389 = vsel %vm290, %v385, 0.0
    %v390 = vsel %vm290, %v386, 0.0
    %v391 = vadd.f32 %v389, %v390
    %v392 = vsel %vm290, %v387, 0.0
    %v393 = vadd.f32 %v391, %v392
    %v394 = vsel %vm290, %v388, 0.0
    %v395 = vadd.f32 %v393, %v394
    %v396 = vrot.slane %v395, 4
    %v397 = vadd.f32 %v395, %v396
    %v398 = vrot.slane %v397, 2
    %v399 = vadd.f32 %v397, %v398
    %v400 = vrot.slane %v399, 1
    %v401 = vadd.f32 %v399, %v400
    %v402 = vmul.f32 %v401, 0.03125
    %v403 = vld [vmem:[#allocation10] sm:$0x1]
    %v404 = vadd.f32 %v402, 1e-05
    %v405 = vrsqrt.pop %v404
    %v406 = vmul.f32 %v403, %v405
    %v408 = vlaneseq
    %v409 = vshrl.u32 %v408, 7
    %v410 = vsub.s32 0, %v409
    %v411 = vrot.slane %v406, %v410
    %v413 = vmul.f32 %v381, %v411
    %v414 = vmul.f32 %v382, %v411
    %v415 = vmul.f32 %v383, %v411
    %v416 = vmul.f32 %v384, %v411
    %v417 = vld [vmem:[#allocation11] sm:$0x1]
    %v419 = vlaneseq
    %v420 = vshrl.u32 %v419, 7
    %v421 = vsub.s32 0, %v420
    %v422 = vrot.slane %v417, %v421
    %v424 = vadd.f32 %v413, %v422
    %v425 = vadd.f32 %v414, %v422
    %v426 = vadd.f32 %v415, %v422
    %v427 = vadd.f32 %v416, %v422
    %vm428 = vcmp.gt.f32.partialorder %v424, 0.0
    %vm429 = vcmp.gt.f32.partialorder %v425, 0.0
    %vm430 = vcmp.gt.f32.partialorder %v426, 0.0
    %vm431 = vcmp.gt.f32.partialorder %v427, 0.0
    %v432 = vmin.f32 %v424, 0.0
    %v433 = vmin.f32 %v425, 0.0
    %v434 = vmin.f32 %v426, 0.0
    %v435 = vmin.f32 %v427, 0.0
    %v436 = vmul.f32 %v432, 1.442695
    %v437 = vpow.pop %v436
    %v438 = vmul.f32 %v433, 1.442695
    %v439 = vpow.pop %v438
    %v440 = vmul.f32 %v434, 1.442695
    %v441 = vpow.pop %v440
    %v442 = vmul.f32 %v435, 1.442695
    %v443 = vpow.pop %v442
    %v444 = vsub.f32 %v437, 1.0
    %v445 = vsub.f32 %v439, 1.0
    %v446 = vsub.f32 %v441, 1.0
    %v447 = vsub.f32 %v443, 1.0
    %v448 = vsel %vm428, %v424, %v444
    %v449 = vsel %vm429, %v425, %v445
    %v450 = vsel %vm430, %v426, %v446
    %v451 = vsel %vm431, %v427, %v447
    %452 = vst.msk [vmem:[#allocation13] sm:$0xff] %vm290, %v448
    %453 = vst.msk [vmem:[#allocation13 + $0x8] sm:$0xff] %vm290, %v449
    %454 = vst.msk [vmem:[#allocation13 + $0x10] sm:$0xff] %vm290, %v450
    %455 = vst.msk [vmem:[#allocation13 + $0x18] sm:$0xff] %vm290, %v451
    // Predicated region
    $region50: #{spherical_cheb_pool.1} parent=1 // pred_check
      _
    $region51: #{spherical_cheb_pool.1} parent=1 // pred_check_branch
      %457 = sbr.rel (0) target = $region53
    $region52: #{spherical_cheb_pool.1} parent=1 // pred_region
      %s459 = ssub.s32 512, 512
      %460 = vsyncadd [#allocation4], %s459
      %s461 = sshll.u32 [#allocation13], 4
      %s462 = int_to_ptr.vmem [resolvable:$true] %s461
      %467 = dma.vmem_to_hbm [thread:$0]  %s462, 512, %s6, [#allocation4], 128, 128, 8
    $region53: #{spherical_cheb_pool.1} parent=1 // pred_fallthru
      _
    // Predicated region
    $region54: #{spherical_cheb_pool.1} parent=1 // pred_check
      _
    $region55: #{spherical_cheb_pool.1} parent=1 // pred_check_branch
      %469 = sbr.rel (0) target = $region57
    $region56: #{spherical_cheb_pool.1} parent=1 // pred_region
      %470 = dma.done [#allocation4], 512
    $region57: #{spherical_cheb_pool.1} parent=1 // pred_fallthru
      _
    %471 = vsyncpa [#allocation3], 1
    %472 = vsyncpa [#allocation6], 1
    %473 = vsyncpa [#allocation9], 1
    %474 = vsyncpa [#allocation12], 1
    %475 = vsyncpa [#allocation4], 1

</llo_original>
